<compile_context>
chip_gen: v5e
topology: v5e:2x2
jax: 0.10.0
libtpu: 0.0.40
codegen_flags: <defaults>
</compile_context>

<pallas_src>
import functools

import jax
import jax.numpy as jnp
from jax.experimental import pallas as pl
from jax.experimental.pallas import tpu as pltpu


def _mtm_kernel(x_ref, style_ref, d_ref, rhs_ref, o_ref, *, BT, H, WCout):
    # x_ref:     (BT, H, K*WpCinP)   K ky-shifted, zero-padded input rows (lane aligned)
    # style_ref: (BT, 1, K*WpCinP)   per-batch modulation, tiled to match x layout
    # d_ref:     (BT, 1, W*Cout)     per-batch demodulation, tiled along width
    # rhs_ref:   (K*WpCinP, W*Cout)  banded base-conv weight matrix (batch invariant)
    # o_ref:     (BT, H, W*Cout)     output slab (lane dense)

    # Fold modulation into the activations with a single multiply (hoisted out of taps).
    xs = x_ref[...] * style_ref[...]                            # (BT, H, K*WpCinP)

    # Convolution as ONE deep MXU matmul; output comes out directly in the
    # (rows = BT*H, lanes = W*Cout) layout -> no relayout before the store.
    lhs = xs.reshape(BT * H, xs.shape[-1])                      # free reshape (aligned)
    acc = jnp.dot(lhs, rhs_ref[...], preferred_element_type=jnp.float32)

    # Demodulate + LeakyReLU(0.2) (single VALU max), then one lane-dense store.
    out = acc.reshape(BT, H, WCout) * d_ref[...]
    o_ref[...] = jnp.maximum(out, 0.2 * out).astype(o_ref.dtype)


def _step_vmem_bytes(bt, H, lane_in, lane_out):
    """Approx per-grid-step VMEM (double-buffered blocks + rhs)."""
    x_b = 2 * bt * H * lane_in * 4
    s_b = 2 * bt * 1 * lane_in * 4
    d_b = 2 * bt * 1 * lane_out * 4
    o_b = 2 * bt * H * lane_out * 4
    r_b = 2 * lane_in * lane_out * 4      # grid-invariant, but budget 2 buffers
    return x_b + s_b + d_b + o_b + r_b


def _pick_batch_tile(B, H, lane_in, lane_out, vmem_budget_bytes=12 << 20):
    """VMEM- and generation-aware batch tile (batch elems per grid step)."""
    kind = ""
    try:
        kind = jax.devices()[0].device_kind.lower()
    except Exception:  # pragma: no cover - defensive; fall back to v6e-like defaults
        pass
    # v5e MXU is 128 rows deep -> M ~ 128; v6e/v7x -> M ~ 256.
    target_m = 128 if ("v5 lite" in kind or "v5e" in kind) else 256
    # Chips with >= 2 TensorCores per chip (v7x, megacore v4/v5p): keep >= 2 grid
    # steps so the "parallel" batch axis can shard across cores.
    multi_tc = any(t in kind for t in ("v7", "v4", "v5p", "v5 p"))
    bt_cap = max(1, B // 2) if (multi_tc and B >= 2) else B

    best = 1
    for bt in range(1, bt_cap + 1):
        if B % bt:
            continue
        if bt * H > target_m:
            break
        if _step_vmem_bytes(bt, H, lane_in, lane_out) > vmem_budget_bytes:
            break
        best = bt
    return best


def mtm_forward(x_nchw, w_lat, base_w, mod_w, mod_b):
    """Forward pass of ModulatedTransformationModule (use_offset=False).

    x_nchw: (B, Cin, H, W) float32   -- PyTorch NCHW layout
    w_lat:  (B, L) float32           -- latent codes
    base_w: (Cout, Cin, K, K)        -- ModulatedConv.weight
    mod_w:  (Cin, L)                 -- modulation Linear weight
    mod_b:  (Cin,)                   -- modulation Linear bias
    returns (B, Cout, H, W) float32
    """
    B, Cin, H, W = x_nchw.shape
    Cout, _, K, _ = base_w.shape
    pad = K // 2
    Hp, Wp = H + 2 * pad, W + 2 * pad
    WpCin = Wp * Cin
    WpCinP = pl.cdiv(WpCin, 128) * 128          # lane-align the packed input dim
    KWpCinP = K * WpCinP
    WCout = W * Cout

    # ---- per-batch scalar math + batch-invariant weights: plain XLA ----
    style = w_lat @ mod_w.T + mod_b                          # (B, Cin)
    sq = jnp.sum(base_w * base_w, axis=(2, 3))               # (Cout, Cin) sum over taps
    d = jax.lax.rsqrt((style * style) @ sq.T + 1e-8)         # (B, Cout)

    # style tiled to match the packed/padded input layout: idx = ky*WpCinP + jj*Cin + c
    style_row = jnp.tile(style, (1, Wp))                     # (B, WpCin)
    style_row = jnp.pad(style_row, ((0, 0), (0, WpCinP - WpCin)))
    style_t = jnp.tile(style_row, (1, K)).reshape(B, 1, KWpCinP)
    # demod tiled along width: idx = j*Cout + co
    d_t = jnp.tile(d, (1, W)).reshape(B, 1, WCout)

    # Banded conv-as-matmul RHS (batch invariant, built once):
    #   rhs[ky*WpCinP + jj*Cin + c, j*Cout + co] = base_w[co, c, ky, jj - j]
    #     if 0 <= jj-j < K else 0 (and 0 for lane-padding rows).
    base_t = jnp.transpose(base_w, (2, 3, 1, 0))             # (K, K, Cin, Cout)
    jj = jnp.arange(Wp)
    j = jnp.arange(W)
    kx = jj[:, None] - j[None, :]                            # (Wp, W)
    valid = (kx >= 0) & (kx < K)
    kx_c = jnp.clip(kx, 0, K - 1)
    band = base_t[:, kx_c]                                   # (K, Wp, W, Cin, Cout)
    band = jnp.where(valid[None, :, :, None, None], band, 0.0)
    rhs = jnp.transpose(band, (0, 1, 3, 2, 4)).reshape(K, WpCin, WCout)
    rhs = jnp.pad(rhs, ((0, 0), (0, WpCinP - WpCin), (0, 0)))
    rhs = rhs.reshape(KWpCinP, WCout)

    # ---- layout: NCHW -> padded, lane-aligned, K ky-shifted rows pre-gathered ----
    x_nhwc = jnp.transpose(x_nchw, (0, 2, 3, 1))             # (B, H, W, Cin)
    x_pad = jnp.pad(x_nhwc, ((0, 0), (pad, pad), (pad, pad), (0, 0)))
    x_rows = x_pad.reshape(B, Hp, WpCin)
    x_rows = jnp.pad(x_rows, ((0, 0), (0, 0), (0, WpCinP - WpCin)))   # (B, Hp, WpCinP)
    x_taps = jnp.stack([x_rows[:, ky:ky + H, :] for ky in range(K)], axis=2)
    x_taps = x_taps.reshape(B, H, KWpCinP)                   # (B, H, K*WpCinP)

    BT = _pick_batch_tile(B, H, KWpCinP, WCout)              # batch elems per grid step
    grid = (B // BT,)

    compiler_kwargs = dict(dimension_semantics=("parallel",))
    step_bytes = _step_vmem_bytes(BT, H, KWpCinP, WCout)
    if step_bytes > (16 << 20):
        # Leave headroom but never ask for more than v7x's 64 MiB physical VMEM allows.
        compiler_kwargs["vmem_limit_bytes"] = min(int(step_bytes * 1.25), 48 << 20)

    kernel = functools.partial(_mtm_kernel, BT=BT, H=H, WCout=WCout)

    out_slab = pl.pallas_call(
        kernel,
        out_shape=jax.ShapeDtypeStruct((B, H, WCout), jnp.float32),
        grid=grid,
        in_specs=[
            pl.BlockSpec((BT, H, KWpCinP), lambda b: (b, 0, 0)),
            pl.BlockSpec((BT, 1, KWpCinP), lambda b: (b, 0, 0)),
            pl.BlockSpec((BT, 1, WCout), lambda b: (b, 0, 0)),
            pl.BlockSpec((KWpCinP, WCout), lambda b: (0, 0)),   # grid-invariant
        ],
        out_specs=pl.BlockSpec((BT, H, WCout), lambda b: (b, 0, 0)),
        compiler_params=pltpu.CompilerParams(**compiler_kwargs),
    )(x_taps, style_t, d_t, rhs)

    # lane-dense slab -> NCHW (cheap XLA reshuffle outside the kernel)
    out = out_slab.reshape(B, H, W, Cout)
    return jnp.transpose(out, (0, 3, 1, 2))


def mtm_reference(x_nchw, w_lat, base_w, mod_w, mod_b):
    """Pure-JAX reference matching the PyTorch module exactly."""
    B, Cin, H, W = x_nchw.shape
    Cout, _, K, _ = base_w.shape
    style = w_lat @ mod_w.T + mod_b                              # (B, Cin)
    weight = base_w[None] * style[:, None, :, None, None]        # (B, Cout, Cin, K, K)
    d = jax.lax.rsqrt(jnp.sum(weight ** 2, axis=(2, 3, 4), keepdims=True) + 1e-8)
    weight = weight * d

    def conv_one(xi, wi):
        return jax.lax.conv_general_dilated(
            xi[None], wi, window_strides=(1, 1),
            padding=[(K // 2, K // 2), (K // 2, K // 2)],
            dimension_numbers=("NCHW", "OIHW", "NCHW"))[0]

    y = jax.vmap(conv_one)(x_nchw, weight)
    return jnp.where(y >= 0, y, 0.2 * y)


if __name__ == "__main__":
    # Small shapes consistent with the module.
    B, Cin, Cout, H, W, K, L = 2, 4, 8, 16, 16, 3, 32

    key = jax.random.PRNGKey(0)
    k_x, k_w, k_bw, k_mw = jax.random.split(key, 4)

    x = jax.random.normal(k_x, (B, Cin, H, W), jnp.float32)
    w_lat = jax.random.normal(k_w, (B, L), jnp.float32)

    # Deterministic parameter init (matching __init__ recipes):
    #   conv weight: kaiming_normal_ (fan_in, leaky_relu, a=0) -> std = sqrt(2 / (Cin*K*K))
    #   modulation:  weight ~ N(0, 0.02), bias = 0
    base_w = jax.random.normal(k_bw, (Cout, Cin, K, K), jnp.float32) * jnp.sqrt(
        2.0 / (Cin * K * K))
    mod_w = jax.random.normal(k_mw, (Cin, L), jnp.float32) * 0.02
    mod_b = jnp.zeros((Cin,), jnp.float32)

    out = mtm_forward(x, w_lat, base_w, mod_w, mod_b)
    out = jax.block_until_ready(out)

    ref = jax.block_until_ready(mtm_reference(x, w_lat, base_w, mod_w, mod_b))

    assert out.shape == (B, Cout, H, W), out.shape
    assert jnp.allclose(out, ref, atol=1e-4, rtol=1e-4), (
        float(jnp.max(jnp.abs(out - ref))))

    print("KERNEL_OK")
</pallas_src>

<mosaic_0001>
module attributes {stable_mosaic.version = 11 : i64} {
  func.func @_mtm_kernel(%arg0: i32, %arg1: memref<2x16x384xf32, #tpu.memory_space<vmem>>, %arg2: memref<2x1x384xf32, #tpu.memory_space<vmem>>, %arg3: memref<2x1x128xf32, #tpu.memory_space<vmem>>, %arg4: memref<384x128xf32, #tpu.memory_space<vmem>>, %arg5: memref<2x16x128xf32, #tpu.memory_space<vmem>>) attributes {dimension_semantics = [#tpu.dimension_semantics<parallel>], iteration_bounds = array<i64: 1>, scalar_prefetch = 0 : i64, scratch_operands = 0 : i64, tpu.core_type = #tpu.core_type<tc>, window_params = [{transform_indices = @transform_0, window_bounds = array<i64: 2, 16, 384>}, {transform_indices = @transform_1, window_bounds = array<i64: 2, 1, 384>}, {transform_indices = @transform_2, window_bounds = array<i64: 2, 1, 128>}, {pipeline_mode = #tpu.pipeline_mode<synchronous>, transform_indices = @transform_3, window_bounds = array<i64: 384, 128>}, {transform_indices = @transform_4, window_bounds = array<i64: 2, 16, 128>}]} {
    %c0 = arith.constant 0 : index
    %c0_0 = arith.constant 0 : index
    %c0_1 = arith.constant 0 : index
    %0 = vector.load %arg1[%c0, %c0_0, %c0_1] : memref<2x16x384xf32, #tpu.memory_space<vmem>>, vector<2x16x384xf32>
    %c0_2 = arith.constant 0 : index
    %c0_3 = arith.constant 0 : index
    %c0_4 = arith.constant 0 : index
    %1 = vector.load %arg2[%c0_2, %c0_3, %c0_4] : memref<2x1x384xf32, #tpu.memory_space<vmem>>, vector<2x1x384xf32>
    %2 = vector.broadcast %1 : vector<2x1x384xf32> to vector<2x16x384xf32>
    %3 = arith.mulf %0, %2 : vector<2x16x384xf32>
    %4 = vector.shape_cast %3 : vector<2x16x384xf32> to vector<32x384xf32>
    %c0_5 = arith.constant 0 : index
    %c0_6 = arith.constant 0 : index
    %5 = vector.load %arg4[%c0_5, %c0_6] : memref<384x128xf32, #tpu.memory_space<vmem>>, vector<384x128xf32>
    %cst = arith.constant dense<0.000000e+00> : vector<32x128xf32>
    %6 = tpu.matmul %4, %5, %cst {dimension_numbers = #tpu.dot_dimension_numbers<[1], [0], [0], [1], [0, 0, 1, 1], [], []>} : vector<32x384xf32>, vector<384x128xf32>, vector<32x128xf32> -> vector<32x128xf32>
    %7 = vector.shape_cast %6 : vector<32x128xf32> to vector<2x16x128xf32>
    %c0_7 = arith.constant 0 : index
    %c0_8 = arith.constant 0 : index
    %c0_9 = arith.constant 0 : index
    %8 = vector.load %arg3[%c0_7, %c0_8, %c0_9] : memref<2x1x128xf32, #tpu.memory_space<vmem>>, vector<2x1x128xf32>
    %9 = vector.broadcast %8 : vector<2x1x128xf32> to vector<2x16x128xf32>
    %10 = arith.mulf %7, %9 : vector<2x16x128xf32>
    %cst_10 = arith.constant 2.000000e-01 : f32
    %11 = vector.broadcast %cst_10 : f32 to vector<2x16x128xf32>
    %12 = arith.mulf %11, %10 : vector<2x16x128xf32>
    %13 = arith.maximumf %10, %12 : vector<2x16x128xf32>
    %c0_11 = arith.constant 0 : index
    %c0_12 = arith.constant 0 : index
    %c0_13 = arith.constant 0 : index
    %14 = vector.load %arg5[%c0_11, %c0_12, %c0_13] : memref<2x16x128xf32, #tpu.memory_space<vmem>>, vector<2x16x128xf32>
    tpu.vector_store %arg5[%c0_11, %c0_12, %c0_13], %13 {strides = array<i32>} : memref<2x16x128xf32, #tpu.memory_space<vmem>>, vector<2x16x128xf32>,
    return
  }
  func.func @transform_0(%arg0: i32) -> (i32, i32, i32) {
    %c0_i32 = arith.constant 0 : i32
    %c0_i32_0 = arith.constant 0 : i32
    %c0_i32_1 = arith.constant 0 : i32
    return %arg0, %c0_i32, %c0_i32_0 : i32, i32, i32
  }
  func.func @transform_1(%arg0: i32) -> (i32, i32, i32) {
    %c0_i32 = arith.constant 0 : i32
    %c0_i32_0 = arith.constant 0 : i32
    %c0_i32_1 = arith.constant 0 : i32
    return %arg0, %c0_i32, %c0_i32_0 : i32, i32, i32
  }
  func.func @transform_2(%arg0: i32) -> (i32, i32, i32) {
    %c0_i32 = arith.constant 0 : i32
    %c0_i32_0 = arith.constant 0 : i32
    %c0_i32_1 = arith.constant 0 : i32
    return %arg0, %c0_i32, %c0_i32_0 : i32, i32, i32
  }
  func.func @transform_3(%arg0: i32) -> (i32, i32) {
    %c0_i32 = arith.constant 0 : i32
    %c0_i32_0 = arith.constant 0 : i32
    %c0_i32_1 = arith.constant 0 : i32
    return %c0_i32, %c0_i32_0 : i32, i32
  }
  func.func @transform_4(%arg0: i32) -> (i32, i32, i32) {
    %c0_i32 = arith.constant 0 : i32
    %c0_i32_0 = arith.constant 0 : i32
    %c0_i32_1 = arith.constant 0 : i32
    return %arg0, %c0_i32, %c0_i32_0 : i32, i32, i32
  }
}

</mosaic_0001>

<llo_original>
// kernel: tpu_custom_call.1
$region0: #{tpu_custom_call.1}
  #allocation0 [shape = 'u32[]', space=smem, size = 0x4, offset = 0x4, fixed_abs, tag = 'smem constant byte address 0x4 - core index']
  #allocation1 [shape = 'u32[72,128]{1,0:T(1,128)}', space=vmem, size = 0x9000, scoped, tag = 'internal scratch']
  %s0 = inlined_call_operand.hbm [shape: f32[2,16,384], index: 0, kind: input, shape index: {}]
  %s1 = inlined_call_operand.hbm [shape: f32[2,1,384], index: 1, kind: input, shape index: {}]
  %s2 = inlined_call_operand.hbm [shape: f32[2,1,128], index: 2, kind: input, shape index: {}]
  %s3 = inlined_call_operand.hbm [shape: f32[384,128], index: 3, kind: input, shape index: {}]
  %s4 = inlined_call_operand.hbm [shape: f32[2,16,128], index: 4, kind: output, shape index: {}]
  %s5 = sld [smem:[#allocation0]]
  $region42: #{tpu_custom_call.1} parent=0
    _
  %s7 = ssub.s32 1, %s5
  %s8 = scalar_select 0, %s7, %s5
  $region1: #{tpu_custom_call.1} parent=0
    #allocation2 [shape = 'u8[49152]{0}', space=vmem, size = 0xc000, scoped, tag = 'input window, operand 0, single buffered']
    #allocation3 [shape = 's32[1]{0}', space=sflag, size = 0x4, scoped, tag = 'scoped memory for tpu_custom_call.1']
    #allocation4 [shape = 's32[1]{0}', space=sflag, size = 0x4, scoped, tag = 'scoped memory for tpu_custom_call.1']
    #allocation5 [shape = 'u8[3072]{0}', space=vmem, size = 0xc00, scoped, tag = 'input window, operand 1, single buffered']
    #allocation6 [shape = 's32[1]{0}', space=sflag, size = 0x4, scoped, tag = 'scoped memory for tpu_custom_call.1']
    #allocation7 [shape = 'u8[1024]{0}', space=vmem, size = 0x400, scoped, tag = 'input window, operand 2, single buffered']
    #allocation8 [shape = 'u8[196608]{0}', space=vmem, size = 0x30000, scoped, tag = 'input window, operand 3, single buffered']
    #allocation9 [shape = 's32[1]{0}', space=sflag, size = 0x4, scoped, tag = 'scoped memory for tpu_custom_call.1']
    #allocation10 [shape = 'u8[16384]{0}', space=vmem, size = 0x4000, scoped, tag = 'output window, operand 0, single buffered']
    %9 = vsyncpa [#allocation3], 0
    %10 = vsyncpa [#allocation6], 0
    %11 = vsyncpa [#allocation9], 0
    %12 = vsyncpa [#allocation4], 0
    // Predicated region
    $region2: #{tpu_custom_call.1} parent=1 // pred_check
      _
    $region3: #{tpu_custom_call.1} parent=1 // pred_check_branch
      %14 = sbr.rel (0) target = $region5
    $region4: #{tpu_custom_call.1} parent=1 // pred_region
      %16 = vsyncadd [#allocation3], 0
      %s17 = sshll.u32 %s0, 4
      %s18 = int_to_ptr.hbm [resolvable:$true] %s17
      %s19 = sshll.u32 [#allocation2], 4
      %s20 = int_to_ptr.vmem [resolvable:$true] %s19
      %25 = dma.hbm_to_vmem [thread:$0]  %s18, 1536, %s20, [#allocation3], 384, 384, 24
    $region5: #{tpu_custom_call.1} parent=1 // pred_fallthru
      _
    // Predicated region
    $region6: #{tpu_custom_call.1} parent=1 // pred_check
      _
    $region7: #{tpu_custom_call.1} parent=1 // pred_check_branch
      %27 = sbr.rel (0) target = $region9
    $region8: #{tpu_custom_call.1} parent=1 // pred_region
      %29 = vsyncadd [#allocation6], 0
      %s30 = sshll.u32 %s1, 4
      %s31 = int_to_ptr.hbm [resolvable:$true] %s30
      %s32 = sshll.u32 [#allocation5], 4
      %s33 = int_to_ptr.vmem [resolvable:$true] %s32
      %38 = dma.hbm_to_vmem [thread:$0]  %s31, 96, %s33, [#allocation6], 48, 48, 3
    $region9: #{tpu_custom_call.1} parent=1 // pred_fallthru
      _
    // Predicated region
    $region10: #{tpu_custom_call.1} parent=1 // pred_check
      _
    $region11: #{tpu_custom_call.1} parent=1 // pred_check_branch
      %40 = sbr.rel (0) target = $region13
    $region12: #{tpu_custom_call.1} parent=1 // pred_region
      %42 = vsyncadd [#allocation6], 0
      %s43 = sshll.u32 %s2, 4
      %s44 = int_to_ptr.hbm [resolvable:$true] %s43
      %s45 = sshll.u32 [#allocation7], 4
      %s46 = int_to_ptr.vmem [resolvable:$true] %s45
      %51 = dma.hbm_to_vmem [thread:$0]  %s44, 32, %s46, [#allocation6], 16, 16, 1
    $region13: #{tpu_custom_call.1} parent=1 // pred_fallthru
      _
    // Predicated region
    $region14: #{tpu_custom_call.1} parent=1 // pred_check
      _
    $region15: #{tpu_custom_call.1} parent=1 // pred_check_branch
      %53 = sbr.rel (0) target = $region17
    $region16: #{tpu_custom_call.1} parent=1 // pred_region
      %55 = vsyncadd [#allocation9], 0
      %s56 = sshll.u32 %s3, 4
      %s57 = int_to_ptr.hbm [resolvable:$true] %s56
      %s58 = sshll.u32 [#allocation8], 4
      %s59 = int_to_ptr.vmem [resolvable:$true] %s58
      %64 = dma.hbm_to_vmem [thread:$0]  %s57, 6144, %s59, [#allocation9], 128, 128, 8
    $region17: #{tpu_custom_call.1} parent=1 // pred_fallthru
      _
    // Predicated region
    $region18: #{tpu_custom_call.1} parent=1 // pred_check
      _
    $region19: #{tpu_custom_call.1} parent=1 // pred_check_branch
      %66 = sbr.rel (0) target = $region21
    $region20: #{tpu_custom_call.1} parent=1 // pred_region
      %68 = dma.done [#allocation3], 1536
    $region21: #{tpu_custom_call.1} parent=1 // pred_fallthru
      _
    // Predicated region
    $region22: #{tpu_custom_call.1} parent=1 // pred_check
      _
    $region23: #{tpu_custom_call.1} parent=1 // pred_check_branch
      %70 = sbr.rel (0) target = $region25
    $region24: #{tpu_custom_call.1} parent=1 // pred_region
      %72 = dma.done [#allocation6], 96
    $region25: #{tpu_custom_call.1} parent=1 // pred_fallthru
      _
    // Predicated region
    $region26: #{tpu_custom_call.1} parent=1 // pred_check
      _
    $region27: #{tpu_custom_call.1} parent=1 // pred_check_branch
      %74 = sbr.rel (0) target = $region29
    $region28: #{tpu_custom_call.1} parent=1 // pred_region
      %76 = dma.done [#allocation6], 32
    $region29: #{tpu_custom_call.1} parent=1 // pred_fallthru
      _
    // Predicated region
    $region30: #{tpu_custom_call.1} parent=1 // pred_check
      _
    $region31: #{tpu_custom_call.1} parent=1 // pred_check_branch
      %78 = sbr.rel (0) target = $region33
    $region32: #{tpu_custom_call.1} parent=1 // pred_region
      %80 = dma.done [#allocation9], 6144
    $region33: #{tpu_custom_call.1} parent=1 // pred_fallthru
      _
    %v81 = vld [vmem:[#allocation2] sm:$0xff]
    %v82 = vld [vmem:[#allocation2 + $0x8] sm:$0xff]
    %v83 = vld [vmem:[#allocation2 + $0x10] sm:$0xff]
    %v84 = vld [vmem:[#allocation2 + $0x18] sm:$0xff]
    %v85 = vld [vmem:[#allocation2 + $0x20] sm:$0xff]
    %v86 = vld [vmem:[#allocation2 + $0x28] sm:$0xff]
    %v87 = vld [vmem:[#allocation2 + $0x30] sm:$0xff]
    %v88 = vld [vmem:[#allocation2 + $0x38] sm:$0xff]
    %v89 = vld [vmem:[#allocation2 + $0x40] sm:$0xff]
    %v90 = vld [vmem:[#allocation2 + $0x48] sm:$0xff]
    %v91 = vld [vmem:[#allocation2 + $0x50] sm:$0xff]
    %v92 = vld [vmem:[#allocation2 + $0x58] sm:$0xff]
    %v93 = vld [vmem:[#allocation5] sm:$0x7]
    %v94 = vld [vmem:[#allocation5 + $0x3] sm:$0x7]
    %v97 = vperm.slane %v93, 0
    %v98 = vperm.slane %v93, 1
    %v99 = vperm.slane %v93, 2
    %v100 = vperm.slane %v94, 0
    %v101 = vperm.slane %v94, 1
    %v102 = vperm.slane %v94, 2
    %v109 = vmul.f32 %v81, %v97
    %v110 = vmul.f32 %v82, %v98
    %v111 = vmul.f32 %v83, %v99
    %v112 = vmul.f32 %v84, %v97
    %v113 = vmul.f32 %v85, %v98
    %v114 = vmul.f32 %v86, %v99
    %v115 = vmul.f32 %v87, %v100
    %v116 = vmul.f32 %v88, %v101
    %v117 = vmul.f32 %v89, %v102
    %v118 = vmul.f32 %v90, %v100
    %v119 = vmul.f32 %v91, %v101
    %v120 = vmul.f32 %v92, %v102
    %v121 = vld [vmem:[#allocation8] sm:$0xff]
    %v122 = vld [vmem:[#allocation8 + $0x8] sm:$0xff]
    %v123 = vld [vmem:[#allocation8 + $0x10] sm:$0xff]
    %v124 = vld [vmem:[#allocation8 + $0x18] sm:$0xff]
    %v125 = vld [vmem:[#allocation8 + $0x20] sm:$0xff]
    %v126 = vld [vmem:[#allocation8 + $0x28] sm:$0xff]
    %v127 = vld [vmem:[#allocation8 + $0x30] sm:$0xff]
    %v128 = vld [vmem:[#allocation8 + $0x38] sm:$0xff]
    %v129 = vld [vmem:[#allocation8 + $0x40] sm:$0xff]
    %v130 = vld [vmem:[#allocation8 + $0x48] sm:$0xff]
    %v131 = vld [vmem:[#allocation8 + $0x50] sm:$0xff]
    %v132 = vld [vmem:[#allocation8 + $0x58] sm:$0xff]
    %v133 = vld [vmem:[#allocation8 + $0x60] sm:$0xff]
    %v134 = vld [vmem:[#allocation8 + $0x68] sm:$0xff]
    %v135 = vld [vmem:[#allocation8 + $0x70] sm:$0xff]
    %v136 = vld [vmem:[#allocation8 + $0x78] sm:$0xff]
    %v137 = vld [vmem:[#allocation8 + $0x80] sm:$0xff]
    %v138 = vld [vmem:[#allocation8 + $0x88] sm:$0xff]
    %v139 = vld [vmem:[#allocation8 + $0x90] sm:$0xff]
    %v140 = vld [vmem:[#allocation8 + $0x98] sm:$0xff]
    %v141 = vld [vmem:[#allocation8 + $0xa0] sm:$0xff]
    %v142 = vld [vmem:[#allocation8 + $0xa8] sm:$0xff]
    %v143 = vld [vmem:[#allocation8 + $0xb0] sm:$0xff]
    %v144 = vld [vmem:[#allocation8 + $0xb8] sm:$0xff]
    %v145 = vld [vmem:[#allocation8 + $0xc0] sm:$0xff]
    %v146 = vld [vmem:[#allocation8 + $0xc8] sm:$0xff]
    %v147 = vld [vmem:[#allocation8 + $0xd0] sm:$0xff]
    %v148 = vld [vmem:[#allocation8 + $0xd8] sm:$0xff]
    %v149 = vld [vmem:[#allocation8 + $0xe0] sm:$0xff]
    %v150 = vld [vmem:[#allocation8 + $0xe8] sm:$0xff]
    %v151 = vld [vmem:[#allocation8 + $0xf0] sm:$0xff]
    %v152 = vld [vmem:[#allocation8 + $0xf8] sm:$0xff]
    %v153 = vld [vmem:[#allocation8 + $0x100] sm:$0xff]
    %v154 = vld [vmem:[#allocation8 + $0x108] sm:$0xff]
    %v155 = vld [vmem:[#allocation8 + $0x110] sm:$0xff]
    %v156 = vld [vmem:[#allocation8 + $0x118] sm:$0xff]
    %v157 = vld [vmem:[#allocation8 + $0x120] sm:$0xff]
    %v158 = vld [vmem:[#allocation8 + $0x128] sm:$0xff]
    %v159 = vld [vmem:[#allocation8 + $0x130] sm:$0xff]
    %v160 = vld [vmem:[#allocation8 + $0x138] sm:$0xff]
    %v161 = vld [vmem:[#allocation8 + $0x140] sm:$0xff]
    %v162 = vld [vmem:[#allocation8 + $0x148] sm:$0xff]
    %v163 = vld [vmem:[#allocation8 + $0x150] sm:$0xff]
    %v164 = vld [vmem:[#allocation8 + $0x158] sm:$0xff]
    %v165 = vld [vmem:[#allocation8 + $0x160] sm:$0xff]
    %v166 = vld [vmem:[#allocation8 + $0x168] sm:$0xff]
    %v167 = vld [vmem:[#allocation8 + $0x170] sm:$0xff]
    %v168 = vld [vmem:[#allocation8 + $0x178] sm:$0xff]
    %169 = vmatpush.msra.mxu0 %v136
    %170 = vmatpush.msra.mxu0 %v135
    %171 = vmatpush.msra.mxu0 %v134
    %172 = vmatpush.msra.mxu0 %v133
    %173 = vmatpush.msra.mxu0 %v132
    %174 = vmatpush.msra.mxu0 %v131
    %175 = vmatpush.msra.mxu0 %v130
    %176 = vmatpush.msra.mxu0 %v129
    %177 = vmatpush.msra.mxu0 %v128
    %178 = vmatpush.msra.mxu0 %v127
    %179 = vmatpush.msra.mxu0 %v126
    %180 = vmatpush.msra.mxu0 %v125
    %181 = vmatpush.msra.mxu0 %v124
    %182 = vmatpush.msra.mxu0 %v123
    %183 = vmatpush.msra.mxu0 %v122
    %184 = vmatpush.msra.mxu0 %v121
    %185 = vmatmul.f32.gmra.mxu0 %v109
    %v186 = vpop.f32.mrf.mxu0
    %v187 = vadd.f32 0.0, %v186
    %188 = vmatmul.f32.gmra.mxu0 %v112
    %v189 = vpop.f32.mrf.mxu0
    %v190 = vadd.f32 0.0, %v189
    %191 = vmatmul.f32.gmra.mxu0 %v115
    %v192 = vpop.f32.mrf.mxu0
    %v193 = vadd.f32 0.0, %v192
    %194 = vmatmul.f32.gmra.mxu0 %v118
    %v195 = vpop.f32.mrf.mxu0
    %v196 = vadd.f32 0.0, %v195
    %197 = vdwg.mxu0
    %198 = vmatpush.msra.mxu0 %v152
    %199 = vmatpush.msra.mxu0 %v151
    %200 = vmatpush.msra.mxu0 %v150
    %201 = vmatpush.msra.mxu0 %v149
    %202 = vmatpush.msra.mxu0 %v148
    %203 = vmatpush.msra.mxu0 %v147
    %204 = vmatpush.msra.mxu0 %v146
    %205 = vmatpush.msra.mxu0 %v145
    %206 = vmatpush.msra.mxu0 %v144
    %207 = vmatpush.msra.mxu0 %v143
    %208 = vmatpush.msra.mxu0 %v142
    %209 = vmatpush.msra.mxu0 %v141
    %210 = vmatpush.msra.mxu0 %v140
    %211 = vmatpush.msra.mxu0 %v139
    %212 = vmatpush.msra.mxu0 %v138
    %213 = vmatpush.msra.mxu0 %v137
    %214 = vmatmul.f32.gmra.mxu0 %v110
    %v215 = vpop.f32.mrf.mxu0
    %v216 = vadd.f32 %v187, %v215
    %217 = vmatmul.f32.gmra.mxu0 %v113
    %v218 = vpop.f32.mrf.mxu0
    %v219 = vadd.f32 %v190, %v218
    %220 = vmatmul.f32.gmra.mxu0 %v116
    %v221 = vpop.f32.mrf.mxu0
    %v222 = vadd.f32 %v193, %v221
    %223 = vmatmul.f32.gmra.mxu0 %v119
    %v224 = vpop.f32.mrf.mxu0
    %v225 = vadd.f32 %v196, %v224
    %226 = vdwg.mxu0
    %227 = vmatpush.msra.mxu0 %v168
    %228 = vmatpush.msra.mxu0 %v167
    %229 = vmatpush.msra.mxu0 %v166
    %230 = vmatpush.msra.mxu0 %v165
    %231 = vmatpush.msra.mxu0 %v164
    %232 = vmatpush.msra.mxu0 %v163
    %233 = vmatpush.msra.mxu0 %v162
    %234 = vmatpush.msra.mxu0 %v161
    %235 = vmatpush.msra.mxu0 %v160
    %236 = vmatpush.msra.mxu0 %v159
    %237 = vmatpush.msra.mxu0 %v158
    %238 = vmatpush.msra.mxu0 %v157
    %239 = vmatpush.msra.mxu0 %v156
    %240 = vmatpush.msra.mxu0 %v155
    %241 = vmatpush.msra.mxu0 %v154
    %242 = vmatpush.msra.mxu0 %v153
    %243 = vmatmul.f32.gmra.mxu0 %v111
    %v244 = vpop.f32.mrf.mxu0
    %v245 = vadd.f32 %v216, %v244
    %246 = vmatmul.f32.gmra.mxu0 %v114
    %v247 = vpop.f32.mrf.mxu0
    %v248 = vadd.f32 %v219, %v247
    %249 = vmatmul.f32.gmra.mxu0 %v117
    %v250 = vpop.f32.mrf.mxu0
    %v251 = vadd.f32 %v222, %v250
    %252 = vmatmul.f32.gmra.mxu0 %v120
    %v253 = vpop.f32.mrf.mxu0
    %v254 = vadd.f32 %v225, %v253
    %255 = vdwg.mxu0
    %v256 = vld [vmem:[#allocation7] sm:$0x1]
    %v257 = vld [vmem:[#allocation7 + $0x1] sm:$0x1]
    %v260 = vperm.slane %v256, 0
    %v261 = vperm.slane %v257, 0
    %v264 = vmul.f32 %v245, %v260
    %v265 = vmul.f32 %v248, %v260
    %v266 = vmul.f32 %v251, %v261
    %v267 = vmul.f32 %v254, %v261
    %v268 = vmul.f32 %v264, 0.2
    %v269 = vmul.f32 %v265, 0.2
    %v270 = vmul.f32 %v266, 0.2
    %v271 = vmul.f32 %v267, 0.2
    %v272 = vmax.f32 %v264, %v268
    %v273 = vmax.f32 %v265, %v269
    %v274 = vmax.f32 %v266, %v270
    %v275 = vmax.f32 %v267, %v271
    %276 = vst [vmem:[#allocation10] sm:$0xff] %v272
    %277 = vst [vmem:[#allocation10 + $0x8] sm:$0xff] %v273
    %278 = vst [vmem:[#allocation10 + $0x10] sm:$0xff] %v274
    %279 = vst [vmem:[#allocation10 + $0x18] sm:$0xff] %v275
    // Predicated region
    $region34: #{tpu_custom_call.1} parent=1 // pred_check
      _
    $region35: #{tpu_custom_call.1} parent=1 // pred_check_branch
      %281 = sbr.rel (0) target = $region37
    $region36: #{tpu_custom_call.1} parent=1 // pred_region
      %283 = vsyncadd [#allocation4], 0
      %s284 = sshll.u32 [#allocation10], 4
      %s285 = int_to_ptr.vmem [resolvable:$true] %s284
      %s286 = sshll.u32 %s4, 4
      %s287 = int_to_ptr.hbm [resolvable:$true] %s286
      %292 = dma.vmem_to_hbm [thread:$0]  %s285, 512, %s287, [#allocation4], 128, 128, 8
    $region37: #{tpu_custom_call.1} parent=1 // pred_fallthru
      _
    // Predicated region
    $region38: #{tpu_custom_call.1} parent=1 // pred_check
      _
    $region39: #{tpu_custom_call.1} parent=1 // pred_check_branch
      %294 = sbr.rel (0) target = $region41
    $region40: #{tpu_custom_call.1} parent=1 // pred_region
      %296 = dma.done [#allocation4], 512
    $region41: #{tpu_custom_call.1} parent=1 // pred_fallthru
      _
    %297 = vsyncpa [#allocation3], 1
    %298 = vsyncpa [#allocation6], 1
    %299 = vsyncpa [#allocation9], 1
    %300 = vsyncpa [#allocation4], 1

</llo_original>
